<compile_context>
chip_gen: v5e
topology: v5e:2x2
jax: 0.10.0
libtpu: 0.0.40
codegen_flags: <defaults>
</compile_context>

<pallas_src>
import jax
import jax.numpy as jnp
from jax.experimental import pallas as pl
from jax.experimental.pallas import tpu as pltpu


def _zca_infer_kernel(s_ref, b_ref, x_ref, o_ref):
    # s_ref : (G, L, L)     folded subspace  (weight already row-scaled in)
    # b_ref : (G, L, 1)     folded bias      (bias - S' @ running_mean)
    # x_ref : (1, G, L, T)  tile of activations for one batch element
    # o_ref : (1, G, L, T)
    y = jnp.einsum("gij,gjm->gim", s_ref[...], x_ref[0],
                   preferred_element_type=jnp.float32)
    o_ref[0] = (y + b_ref[...]).astype(o_ref.dtype)


def _pick_tile_hw(hw, bytes_per_col, vmem_budget_bytes, max_tile):
    """Largest HW tile (multiple of 128, or the full extent) fitting budget."""
    cap = min(max_tile, max(128, vmem_budget_bytes // max(bytes_per_col, 1)))
    if hw <= cap:
        return hw                      # block == full dim is always legal
    t = (cap // 128) * 128
    while t >= 128:
        if hw % t == 0:
            return t
        t -= 128
    return hw                          # fallback: full rows (no aligned divisor)


def zca_norm_svdpi_infer(x_nchw, running_subspace, running_mean, weight, bias,
                         groups=1, max_tile=2048,
                         vmem_budget_bytes=16 * 1024 * 1024):
    """Eval-mode forward of ZCANormSVDPI.

    x_nchw          : (N, C, H, W)
    running_subspace: (G, L, L) with L = C // G
    running_mean    : (C, 1)
    weight, bias    : (C, 1)
    """
    N, C, H, W = x_nchw.shape
    G = groups
    assert C % G == 0
    L = C // G
    HW = H * W

    # --- host-side fold (tiny, f32): y = w*(S@(x-mu)) + b == S'@x + b' -------
    S = running_subspace.astype(jnp.float32)
    w = weight.reshape(G, L, 1).astype(jnp.float32)
    b = bias.reshape(G, L, 1).astype(jnp.float32)
    mu = running_mean.reshape(G, L, 1).astype(jnp.float32)
    s_fold = w * S                                                   # (G, L, L)
    b_fold = b - jnp.einsum("gij,gjk->gik", s_fold, mu,
                            precision="highest")                     # (G, L, 1)

    # --- transpose-free layout: NCHW -> (N, G, L, HW) (contiguous reshape) ---
    x_nglm = x_nchw.reshape(N, G, L, HW)

    # --- tile selection under a VMEM budget ----------------------------------
    itemsize = jnp.dtype(x_nchw.dtype).itemsize
    bytes_per_col = 4 * G * L * itemsize        # x + out, double-buffered each
    thw = _pick_tile_hw(HW, bytes_per_col, vmem_budget_bytes, max_tile)

    grid = (N, HW // thw)

    out = pl.pallas_call(
        _zca_infer_kernel,
        out_shape=jax.ShapeDtypeStruct((N, G, L, HW), x_nchw.dtype),
        grid_spec=pltpu.PrefetchScalarGridSpec(
            num_scalar_prefetch=0,
            grid=grid,
            in_specs=[
                pl.BlockSpec((G, L, L), lambda n, m: (0, 0, 0)),      # S'
                pl.BlockSpec((G, L, 1), lambda n, m: (0, 0, 0)),      # b'
                pl.BlockSpec((1, G, L, thw), lambda n, m: (n, 0, 0, m)),  # x
            ],
            out_specs=pl.BlockSpec((1, G, L, thw), lambda n, m: (n, 0, 0, m)),
        ),
        compiler_params=pltpu.CompilerParams(
            dimension_semantics=("parallel", "parallel"),
            vmem_limit_bytes=32 * 1024 * 1024),
    )(s_fold, b_fold, x_nglm)

    # --- (N, G, L, HW) -> NCHW (contiguous reshape) ---------------------------
    return out.reshape(N, C, H, W)


def _reference(x_nchw, running_subspace, running_mean, weight, bias, groups=1):
    """Pure-jnp reference mirroring the PyTorch eval branch."""
    N, C, H, W = x_nchw.shape
    G = groups
    L = C // G
    x = jnp.transpose(x_nchw, (1, 0, 2, 3)).reshape(C, -1)
    x = x - running_mean
    xg = x.reshape(G, L, -1)
    yg = jnp.einsum("gij,gjm->gim", running_subspace, xg, precision="highest")
    y = yg.reshape(C, -1)
    y = y * weight + bias
    return jnp.transpose(y.reshape(C, N, H, W), (1, 0, 2, 3))


if __name__ == "__main__":
    key = jax.random.PRNGKey(0)

    def run_case(case_key, N, C, H, W, G):
        L = C // G
        ks = jax.random.split(case_key, 5)
        x = jax.random.normal(ks[0], (N, C, H, W), dtype=jnp.float32)
        # weight ~ U[0,1), bias/running_mean perturbed, subspace ~ I + noise
        weight = jax.random.uniform(ks[1], (C, 1), dtype=jnp.float32)
        bias = 0.1 * jax.random.normal(ks[2], (C, 1), dtype=jnp.float32)
        running_mean = 0.1 * jax.random.normal(ks[3], (C, 1), dtype=jnp.float32)
        running_subspace = (
            jnp.stack([jnp.eye(L, dtype=jnp.float32)] * G, axis=0)
            + 0.05 * jax.random.normal(ks[4], (G, L, L), dtype=jnp.float32))

        out = zca_norm_svdpi_infer(x, running_subspace, running_mean, weight,
                                   bias, groups=G)
        out = jax.block_until_ready(out)

        ref = _reference(x, running_subspace, running_mean, weight, bias,
                         groups=G)
        assert out.shape == x.shape
        err = float(jnp.max(jnp.abs(out - ref)))
        assert jnp.allclose(out, ref, atol=1e-4, rtol=1e-4), err

    k1, k2 = jax.random.split(key)
    # Module defaults: num_features=4, groups=1; N=2, H=W=16.
    run_case(k1, N=2, C=4, H=16, W=16, G=1)
    # Grouped path: C=16, G=2 (L=8), HW=64 (full-extent tile < 128).
    run_case(k2, N=2, C=16, H=8, W=8, G=2)

    print("KERNEL_OK")
</pallas_src>

<mosaic_0001>
module attributes {stable_mosaic.version = 11 : i64} {
  func.func @_zca_infer_kernel(%arg0: i32, %arg1: i32, %arg2: memref<1x4x4xf32, #tpu.memory_space<vmem>>, %arg3: memref<1x4x1xf32, #tpu.memory_space<vmem>>, %arg4: memref<1x1x4x256xf32, #tpu.memory_space<vmem>>, %arg5: memref<1x1x4x256xf32, #tpu.memory_space<vmem>>) attributes {dimension_semantics = [#tpu.dimension_semantics<parallel>, #tpu.dimension_semantics<parallel>], iteration_bounds = array<i64: 2, 1>, scalar_prefetch = 0 : i64, scratch_operands = 0 : i64, tpu.core_type = #tpu.core_type<tc>, window_params = [{pipeline_mode = #tpu.pipeline_mode<synchronous>, transform_indices = @transform_0, window_bounds = array<i64: 1, 4, 4>}, {pipeline_mode = #tpu.pipeline_mode<synchronous>, transform_indices = @transform_1, window_bounds = array<i64: 1, 4, 1>}, {transform_indices = @transform_2, window_bounds = array<i64: 1, 1, 4, 256>}, {transform_indices = @transform_3, window_bounds = array<i64: 1, 1, 4, 256>}]} {
    %c0 = arith.constant 0 : index
    %c0_0 = arith.constant 0 : index
    %c0_1 = arith.constant 0 : index
    %0 = vector.load %arg2[%c0, %c0_0, %c0_1] : memref<1x4x4xf32, #tpu.memory_space<vmem>>, vector<1x4x4xf32>
    %c0_2 = arith.constant 0 : index
    %c0_3 = arith.constant 0 : index
    %c0_4 = arith.constant 0 : index
    %c0_5 = arith.constant 0 : index
    %1 = vector.load %arg4[%c0_2, %c0_3, %c0_4, %c0_5] : memref<1x1x4x256xf32, #tpu.memory_space<vmem>>, vector<1x1x4x256xf32>
    %2 = vector.shape_cast %1 : vector<1x1x4x256xf32> to vector<1x4x256xf32>
    "tpu.trace_start"() <{level = 10 : i32, message = "gij,gjm->gim"}> : () -> ()
    %cst = arith.constant dense<0.000000e+00> : vector<1x4x256xf32>
    %3 = tpu.matmul %0, %2, %cst {dimension_numbers = #tpu.dot_dimension_numbers<[2], [1], [1], [2], [0, 0, 0, 1, 1, 2], [0], [0]>} : vector<1x4x4xf32>, vector<1x4x256xf32>, vector<1x4x256xf32> -> vector<1x4x256xf32>
    "tpu.trace_stop"() : () -> ()
    %c0_6 = arith.constant 0 : index
    %c0_7 = arith.constant 0 : index
    %c0_8 = arith.constant 0 : index
    %4 = vector.load %arg3[%c0_6, %c0_7, %c0_8] : memref<1x4x1xf32, #tpu.memory_space<vmem>>, vector<1x4x1xf32>
    %5 = vector.broadcast %4 : vector<1x4x1xf32> to vector<1x4x256xf32>
    %6 = arith.addf %3, %5 : vector<1x4x256xf32>
    %c0_9 = arith.constant 0 : index
    %c0_10 = arith.constant 0 : index
    %c0_11 = arith.constant 0 : index
    %c0_12 = arith.constant 0 : index
    %7 = vector.load %arg5[%c0_9, %c0_10, %c0_11, %c0_12] : memref<1x1x4x256xf32, #tpu.memory_space<vmem>>, vector<1x1x4x256xf32>
    %8 = vector.shape_cast %7 : vector<1x1x4x256xf32> to vector<1x4x256xf32>
    %9 = vector.shape_cast %6 : vector<1x4x256xf32> to vector<1x1x4x256xf32>
    tpu.vector_store %arg5[%c0_9, %c0_10, %c0_11, %c0_12], %9 {strides = array<i32>} : memref<1x1x4x256xf32, #tpu.memory_space<vmem>>, vector<1x1x4x256xf32>,
    return
  }
  func.func @transform_0(%arg0: i32, %arg1: i32) -> (i32, i32, i32) {
    %c0_i32 = arith.constant 0 : i32
    %c0_i32_0 = arith.constant 0 : i32
    %c0_i32_1 = arith.constant 0 : i32
    %c0_i32_2 = arith.constant 0 : i32
    return %c0_i32, %c0_i32_0, %c0_i32_1 : i32, i32, i32
  }
  func.func @transform_1(%arg0: i32, %arg1: i32) -> (i32, i32, i32) {
    %c0_i32 = arith.constant 0 : i32
    %c0_i32_0 = arith.constant 0 : i32
    %c0_i32_1 = arith.constant 0 : i32
    %c0_i32_2 = arith.constant 0 : i32
    return %c0_i32, %c0_i32_0, %c0_i32_1 : i32, i32, i32
  }
  func.func @transform_2(%arg0: i32, %arg1: i32) -> (i32, i32, i32, i32) {
    %c0_i32 = arith.constant 0 : i32
    %c0_i32_0 = arith.constant 0 : i32
    %c0_i32_1 = arith.constant 0 : i32
    return %arg0, %c0_i32, %c0_i32_0, %arg1 : i32, i32, i32, i32
  }
  func.func @transform_3(%arg0: i32, %arg1: i32) -> (i32, i32, i32, i32) {
    %c0_i32 = arith.constant 0 : i32
    %c0_i32_0 = arith.constant 0 : i32
    %c0_i32_1 = arith.constant 0 : i32
    return %arg0, %c0_i32, %c0_i32_0, %arg1 : i32, i32, i32, i32
  }
}

</mosaic_0001>

<llo_original>
// kernel: tpu_custom_call.1
$region0: #{tpu_custom_call.1}
  #allocation0 [shape = 'u32[]', space=smem, size = 0x4, offset = 0x4, fixed_abs, tag = 'smem constant byte address 0x4 - core index']
  #allocation1 [shape = 'u32[72,128]{1,0:T(1,128)}', space=vmem, size = 0x9000, scoped, tag = 'internal scratch']
  %s0 = inlined_call_operand.vmem [shape: f32[1,4,4], index: 0, kind: input, shape index: {}]
  %s1 = inlined_call_operand.vmem [shape: f32[1,4,1], index: 1, kind: input, shape index: {}]
  %s2 = inlined_call_operand.hbm [shape: f32[2,1,4,256], index: 2, kind: input, shape index: {}]
  %s3 = inlined_call_operand.hbm [shape: f32[2,1,4,256], index: 3, kind: output, shape index: {}]
  %s4 = sld [smem:[#allocation0]]
  $region49: #{tpu_custom_call.1} parent=0
    _
  %s6 = ssub.s32 1, %s4
  %s7 = scalar_select 0, %s6, %s4
  $region1: #{tpu_custom_call.1} parent=0
    #allocation2 [shape = 'u8[8192]{0}', space=vmem, size = 0x2000, scoped, tag = 'input window, operand 2']
    #allocation3 [shape = 's32[2]{0}', space=sflag, size = 0x8, scoped, tag = 'scoped memory for tpu_custom_call.1']
    #allocation4 [shape = 's32[2]{0}', space=sflag, size = 0x8, scoped, tag = 'scoped memory for tpu_custom_call.1']
    #allocation5 [shape = 'u8[8192]{0}', space=vmem, size = 0x2000, scoped, tag = 'output window, operand 0']
    %8 = vsyncpa [#allocation3], 0
    %s9 = scalar_lea.sflag [#allocation3], 1
    %10 = vsyncpa %s9, 0
    %11 = vsyncpa [#allocation4], 0
    %s12 = scalar_lea.sflag [#allocation4], 1
    %13 = vsyncpa %s12, 0
    loop: start=0, step=1, limit=4
    $region2: #{tpu_custom_call.1} parent=1 // loop_pre_header
      _
    $region3: #{tpu_custom_call.1} parent=1 // loop_header
      %s15 = sphi 0, %s19
      %p16 = scmp.ge.s32.totalorder %s15, 4
      %s22 = sphi 0, %s34
      %s23 = sphi 0, %s30
      %s24 = sphi 0, %s22
      %s25 = sphi 0, %s23
      %s26 = sphi 0, %s24
      %s27 = sphi 0, %s25
      %s35 = sphi 0, %s35
      %s37 = sphi 0, %s35
      %s38 = sphi 0, %s37
      %s52 = sphi 0, %s38
      %s56 = sphi 0, %s56
      %s58 = sphi 0, %s56
      %s59 = sphi 0, %s58
      %s73 = sphi 0, %s59
      %s81 = sphi 0, %s83
      %s84 = sphi 0, %s81
      %s85 = sphi 0, %s84
      %s101 = sphi 0, %s85
      %s109 = sphi 0, %s111
      %s112 = sphi 0, %s109
      %s113 = sphi 0, %s112
      %s129 = sphi 0, %s113
    $region4: #{tpu_custom_call.1} parent=1 // loop_header_branch
      %18 = sbr.rel (%p16) target = $region8
    $region5: #{tpu_custom_call.1} parent=1 // loop_body
      %s20 = ssub.s32 %s15, 1
      %s21 = ssub.s32 %s15, 2
      %s28 = sadd.s32 1, %s23
      %p29 = scmp.ge.s32.totalorder %s28, 1
      %s30 = scalar_select %p29, 0, %s28
      %s31 = sadd.s32 1, %s22
      %s32 = scalar_select %p29, %s31, %s22
      %p33 = scmp.ge.s32.totalorder %s32, 2
      %s34 = scalar_select %p33, 0, %s32
      %s36 = sadd.s32 %s35, 1
      %p39 = scmp.eq.s32.totalorder %s15, 1
      %p40 = scmp.ne.s32.totalorder %s35, %s37
      %p41 = scmp.eq.s32.totalorder %s15, 0
      %p42 = por %p40, %p41
      %p43 = scmp.ne.s32.totalorder %s35, %s37
      %p44 = scmp.eq.s32.totalorder %s20, 1
      %p45 = por %p43, %p44
      %p46 = scmp.ne.s32.totalorder %s37, %s38
      %p47 = scmp.eq.s32.totalorder %s20, 0
      %p48 = por %p46, %p47
      %p49 = scmp.ne.s32.totalorder %s37, %s38
      %p50 = scmp.eq.s32.totalorder %s21, 1
      %p51 = por %p49, %p50
      %p53 = scmp.ne.s32.totalorder %s38, %s52
      %p54 = scmp.eq.s32.totalorder %s21, 0
      %p55 = por %p53, %p54
      %s57 = sadd.s32 %s56, 1
      %p60 = scmp.eq.s32.totalorder %s15, 1
      %p61 = scmp.ne.s32.totalorder %s56, %s58
      %p62 = scmp.eq.s32.totalorder %s15, 0
      %p63 = por %p61, %p62
      %p64 = scmp.ne.s32.totalorder %s56, %s58
      %p65 = scmp.eq.s32.totalorder %s20, 1
      %p66 = por %p64, %p65
      %p67 = scmp.ne.s32.totalorder %s58, %s59
      %p68 = scmp.eq.s32.totalorder %s20, 0
      %p69 = por %p67, %p68
      %p70 = scmp.ne.s32.totalorder %s58, %s59
      %p71 = scmp.eq.s32.totalorder %s21, 1
      %p72 = por %p70, %p71
      %p74 = scmp.ne.s32.totalorder %s59, %s73
      %p75 = scmp.eq.s32.totalorder %s21, 0
      %p76 = por %p74, %p75
      %s77 = ssub.s32 %s22, %s34
      %s78 = ssub.s32 %s23, %s30
      %s79 = sor.u32 %s77, %s78
      %p80 = scmp.eq.s32.totalorder %s79, 0
      %s82 = sadd.s32 %s81, 1
      %s83 = scalar_select %p80, %s81, %s82
      %p86 = pneg %p80
      %p87 = scmp.eq.s32.totalorder %s15, 1
      %p88 = por %p86, %p87
      %p89 = scmp.ne.s32.totalorder %s81, %s84
      %p90 = scmp.eq.s32.totalorder %s15, 0
      %p91 = por %p89, %p90
      %p92 = scmp.ne.s32.totalorder %s81, %s84
      %p93 = scmp.eq.s32.totalorder %s20, 1
      %p94 = por %p92, %p93
      %p95 = scmp.ne.s32.totalorder %s84, %s85
      %p96 = scmp.eq.s32.totalorder %s20, 0
      %p97 = por %p95, %p96
      %p98 = scmp.ne.s32.totalorder %s84, %s85
      %p99 = scmp.eq.s32.totalorder %s21, 1
      %p100 = por %p98, %p99
      %p102 = scmp.ne.s32.totalorder %s85, %s101
      %p103 = scmp.eq.s32.totalorder %s21, 0
      %p104 = por %p102, %p103
      %s105 = ssub.s32 %s22, %s34
      %s106 = ssub.s32 %s23, %s30
      %s107 = sor.u32 %s105, %s106
      %p108 = scmp.eq.s32.totalorder %s107, 0
      %s110 = sadd.s32 %s109, 1
      %s111 = scalar_select %p108, %s109, %s110
      %p114 = pneg %p108
      %p115 = scmp.eq.s32.totalorder %s15, 1
      %p116 = por %p114, %p115
      %p117 = scmp.ne.s32.totalorder %s109, %s112
      %p118 = scmp.eq.s32.totalorder %s15, 0
      %p119 = por %p117, %p118
      %p120 = scmp.ne.s32.totalorder %s109, %s112
      %p121 = scmp.eq.s32.totalorder %s20, 1
      %p122 = por %p120, %p121
      %p123 = scmp.ne.s32.totalorder %s112, %s113
      %p124 = scmp.eq.s32.totalorder %s20, 0
      %p125 = por %p123, %p124
      %p126 = scmp.ne.s32.totalorder %s112, %s113
      %p127 = scmp.eq.s32.totalorder %s21, 1
      %p128 = por %p126, %p127
      %p130 = scmp.ne.s32.totalorder %s113, %s129
      %p131 = scmp.eq.s32.totalorder %s21, 0
      %p132 = por %p130, %p131
      %p133 = scmp.le.s32.totalorder 1, %s15
      %p134 = scmp.lt.s32.totalorder %s15, 3
      %p135 = pnand %p133, %p134
      %p136 = pneg %p135
      // Predicated region
      $region9: #{tpu_custom_call.1} parent=5 // pred_check
        _
      $region10: #{tpu_custom_call.1} parent=5 // pred_check_branch
        %138 = sbr.rel (%p135) target = $region12
      $region11: #{tpu_custom_call.1} parent=5 // pred_region
        %s139 = ssub.s32 %s15, 1
        // Predicated region
        $region13: #{tpu_custom_call.1} parent=11 // pred_check
          %p140 = pneg %p48
        $region14: #{tpu_custom_call.1} parent=11 // pred_check_branch
          %142 = sbr.rel (%p140) target = $region16
        $region15: #{tpu_custom_call.1} parent=11 // pred_region
          _
        $region16: #{tpu_custom_call.1} parent=11 // pred_fallthru
          _
        // Predicated region
        $region17: #{tpu_custom_call.1} parent=11 // pred_check
          %p143 = pneg %p69
        $region18: #{tpu_custom_call.1} parent=11 // pred_check_branch
          %145 = sbr.rel (%p143) target = $region20
        $region19: #{tpu_custom_call.1} parent=11 // pred_region
          _
        $region20: #{tpu_custom_call.1} parent=11 // pred_fallthru
          _
      $region12: #{tpu_custom_call.1} parent=5 // pred_fallthru
        _
      %p146 = scmp.lt.s32.totalorder %s15, 2
      // Predicated region
      $region21: #{tpu_custom_call.1} parent=5 // pred_check
        %p147 = pneg %p146
      $region22: #{tpu_custom_call.1} parent=5 // pred_check_branch
        %149 = sbr.rel (%p147) target = $region24
      $region23: #{tpu_custom_call.1} parent=5 // pred_region
        // Predicated region
        $region25: #{tpu_custom_call.1} parent=23 // pred_check
          %p150 = pneg %p91
        $region26: #{tpu_custom_call.1} parent=23 // pred_check_branch
          %152 = sbr.rel (%p150) target = $region28
        $region27: #{tpu_custom_call.1} parent=23 // pred_region
          %s153 = sand.u32 %s81, 1
          %s154 = scalar_lea.sflag [#allocation3], %s153
          %s155 = sand.u32 %s81, 1
          %s156 = smul.addr %s155, 8
          %s157 = scalar_lea.vmem [#allocation2], %s156
          %s158 = smul.u32 2, %s23
          %160 = vsyncadd %s154, 0
          %s161 = smul.addr %s22, 2
          %s162 = sadd.s32 %s158, %s161
          %s163 = smul.addr %s162, 4
          %s164 = scalar_lea.hbm %s2, %s163
          %s166 = sshll.u32 %s164, 4
          %s167 = int_to_ptr.hbm [resolvable:$true] %s166
          %s168 = sshll.u32 %s157, 4
          %s169 = int_to_ptr.vmem [resolvable:$true] %s168
          %171 = dma.hbm_to_vmem [thread:$0]  %s167, 128, %s169, %s154
        $region28: #{tpu_custom_call.1} parent=23 // pred_fallthru
          _
      $region24: #{tpu_custom_call.1} parent=5 // pred_fallthru
        _
      %p172 = scmp.le.s32.totalorder 1, %s15
      %p173 = scmp.lt.s32.totalorder %s15, 3
      %p174 = pnand %p172, %p173
      %p175 = pneg %p174
      // Predicated region
      $region29: #{tpu_custom_call.1} parent=5 // pred_check
        _
      $region30: #{tpu_custom_call.1} parent=5 // pred_check_branch
        %177 = sbr.rel (%p174) target = $region32
      $region31: #{tpu_custom_call.1} parent=5 // pred_region
        %s178 = ssub.s32 %s15, 1
        %s179 = sand.u32 %s84, 1
        %s180 = scalar_lea.sflag [#allocation3], %s179
        %s181 = sand.u32 %s84, 1
        %s182 = smul.addr %s181, 8
        %s183 = scalar_lea.vmem [#allocation2], %s182
        // Predicated region
        $region33: #{tpu_custom_call.1} parent=31 // pred_check
          %p184 = pneg %p97
        $region34: #{tpu_custom_call.1} parent=31 // pred_check_branch
          %186 = sbr.rel (%p184) target = $region36
        $region35: #{tpu_custom_call.1} parent=31 // pred_region
          %188 = dma.done %s180, 128
        $region36: #{tpu_custom_call.1} parent=31 // pred_fallthru
          _
        %p189 = pneg %p48
        %p190 = pneg %p45
        %p191 = pneg %p69
        %p192 = pneg %p66
        %s193 = sand.u32 %s84, 1
        %s194 = scalar_lea.sflag [#allocation3], %s193
        %s195 = sand.u32 %s84, 1
        %s196 = smul.addr %s195, 8
        %s197 = scalar_lea.vmem [#allocation2], %s196
        %p198 = pneg %p97
        %p199 = pneg %p94
        %p200 = pneg %p125
        %p201 = pneg %p122
        %s202 = sand.u32 %s112, 1
        %s203 = scalar_lea.sflag [#allocation4], %s202
        %s204 = sand.u32 %s112, 1
        %s205 = smul.addr %s204, 8
        %s206 = scalar_lea.vmem [#allocation5], %s205
        %s207 = smul.u32 2, %s25
        %s208 = smul.u32 2, %s25
        %v209 = vld [vmem:[%s0] sm:$0xf]
        %v210 = vld [vmem:[%s183] sm:$0xff]
        %v211 = vld [vmem:[%s1] sm:$0xf]
        %213 = vset.pattern.permute.xlu0 0
        %214 = vperm.xlu0 %213, %v211
        %v215 = vpop.permute.xlu0 %214
        %218 = vst [vmem:[#allocation1] ss:$2 sm:$0xff] %v210
        %v219 = vld.sshfl [vmem:[#allocation1] sm:$0xff pattern:$0x75316420]
        %v220 = vld.sshfl [vmem:[#allocation1 + $0x8] sm:$0xff pattern:$0x75316420]
        %vm221 = vcmask 31744
        %v223 = vsel %vm221, %v209, 0
        %vm225 = vcmask 1043456
        %v226 = vsel %vm225, %v219, 0
        %v228 = vsel %vm225, %v220, 0
        %230 = vmatpush.msra.mxu0 0.0
        %231 = vmatpush.msra.mxu0 0.0
        %232 = vmatpush.msra.mxu0 0.0
        %233 = vmatpush.msra.mxu0 0.0
        %234 = vmatpush.msra.mxu0 0.0
        %235 = vmatpush.msra.mxu0 0.0
        %236 = vmatpush.msra.mxu0 0.0
        %237 = vmatpush.msra.mxu0 0.0
        %238 = vmatpush.msra.mxu0 0.0
        %239 = vmatpush.msra.mxu0 0.0
        %240 = vmatpush.msra.mxu0 0.0
        %241 = vmatpush.msra.mxu0 0.0
        %242 = vmatpush.msra.mxu0 0.0
        %243 = vmatpush.msra.mxu0 0.0
        %244 = vmatpush.msra.mxu0 0.0
        %245 = vmatpush.msra.mxu0 %v226
        %246 = vmatmul.f32.gmra.mxu0 %v223
        %v247 = vpop.f32.mrf.mxu0
        %v248 = vadd.f32 %v215, %v247
        %249 = vdwg.mxu0
        %250 = vmatpush.msra.mxu0 0.0
        %251 = vmatpush.msra.mxu0 0.0
        %252 = vmatpush.msra.mxu0 0.0
        %253 = vmatpush.msra.mxu0 0.0
        %254 = vmatpush.msra.mxu0 0.0
        %255 = vmatpush.msra.mxu0 0.0
        %256 = vmatpush.msra.mxu0 0.0
        %257 = vmatpush.msra.mxu0 0.0
        %258 = vmatpush.msra.mxu0 0.0
        %259 = vmatpush.msra.mxu0 0.0
        %260 = vmatpush.msra.mxu0 0.0
        %261 = vmatpush.msra.mxu0 0.0
        %262 = vmatpush.msra.mxu0 0.0
        %263 = vmatpush.msra.mxu0 0.0
        %264 = vmatpush.msra.mxu0 0.0
        %265 = vmatpush.msra.mxu0 %v228
        %266 = vmatmul.f32.gmra.mxu0 %v223
        %v267 = vpop.f32.mrf.mxu0
        %v268 = vadd.f32 %v215, %v267
        %269 = vdwg.mxu0
        %v272 = vrot.slane %v268, 4
        %v273 = vsel %vm225, %v248, %v272
        %275 = vst [vmem:[%s206] sm:$0xff] %v273
        %s276 = sand.u32 %s112, 1
        %s277 = scalar_lea.sflag [#allocation4], %s276
        %s278 = sand.u32 %s112, 1
        %s279 = smul.addr %s278, 8
        %s280 = scalar_lea.vmem [#allocation5], %s279
        // Predicated region
        $region37: #{tpu_custom_call.1} parent=31 // pred_check
          %p281 = pneg %p122
        $region38: #{tpu_custom_call.1} parent=31 // pred_check_branch
          %283 = sbr.rel (%p281) target = $region40
        $region39: #{tpu_custom_call.1} parent=31 // pred_region
          %s284 = smul.u32 2, %s25
          %286 = vsyncadd %s277, 0
          %s287 = smul.addr %s24, 2
          %s288 = sadd.s32 %s284, %s287
          %s289 = smul.addr %s288, 4
          %s290 = scalar_lea.hbm %s3, %s289
          %s292 = sshll.u32 %s280, 4
          %s293 = int_to_ptr.vmem [resolvable:$true] %s292
          %s294 = sshll.u32 %s290, 4
          %s295 = int_to_ptr.hbm [resolvable:$true] %s294
          %297 = dma.vmem_to_hbm [thread:$0]  %s293, 128, %s295, %s277
        $region40: #{tpu_custom_call.1} parent=31 // pred_fallthru
          _
      $region32: #{tpu_custom_call.1} parent=5 // pred_fallthru
        _
      %p298 = scmp.le.s32.totalorder 2, %s15
      // Predicated region
      $region41: #{tpu_custom_call.1} parent=5 // pred_check
        %p299 = pneg %p298
      $region42: #{tpu_custom_call.1} parent=5 // pred_check_branch
        %301 = sbr.rel (%p299) target = $region44
      $region43: #{tpu_custom_call.1} parent=5 // pred_region
        %s302 = ssub.s32 %s15, 2
        // Predicated region
        $region45: #{tpu_custom_call.1} parent=43 // pred_check
          %p303 = pneg %p128
        $region46: #{tpu_custom_call.1} parent=43 // pred_check_branch
          %305 = sbr.rel (%p303) target = $region48
        $region47: #{tpu_custom_call.1} parent=43 // pred_region
          %s306 = sand.u32 %s113, 1
          %s307 = scalar_lea.sflag [#allocation4], %s306
          %s308 = sand.u32 %s113, 1
          %s309 = smul.addr %s308, 8
          %s310 = scalar_lea.vmem [#allocation5], %s309
          %312 = dma.done %s307, 128
        $region48: #{tpu_custom_call.1} parent=43 // pred_fallthru
          _
      $region44: #{tpu_custom_call.1} parent=5 // pred_fallthru
        _
    $region6: #{tpu_custom_call.1} parent=1 // loop_footer
      %s19 = sadd.s32 1, %s15
    $region7: #{tpu_custom_call.1} parent=1 // loop_footer_branch
      %14 = sbr.rel target = $region3
    $region8: #{tpu_custom_call.1} parent=1 // loop_exit
      _
    %313 = vsyncpa [#allocation3], 1
    %s314 = scalar_lea.sflag [#allocation3], 1
    %315 = vsyncpa %s314, 1
    %316 = vsyncpa [#allocation4], 1
    %s317 = scalar_lea.sflag [#allocation4], 1
    %318 = vsyncpa %s317, 1

</llo_original>
